<compile_context>
chip_gen: v5e
topology: v5e:2x2
jax: 0.10.0
libtpu: 0.0.40
codegen_flags: <defaults>
</compile_context>

<pallas_src>
import functools

import jax
import jax.numpy as jnp
import numpy as np
from jax.experimental import pallas as pl
from jax.experimental.pallas import tpu as pltpu


def _round_up(x: int, m: int) -> int:
    return ((x + m - 1) // m) * m


def _cdiv(a: int, b: int) -> int:
    return (a + b - 1) // b


def _embedding_heads_kernel(
    idx_ref,     # (TM, C)        int32
    fx_ref,      # (TM, FD)       f32
    cm_ref,      # (TM, ND)       f32
    sp_ref,      # (TM, ND)       f32
    w_emb_ref,   # (C*Vpad, OUT)  f32  block-diagonal stacked embedding tables
    wf_ref,      # (FD, OUT)      f32  proj_float  weight, column-offset padded
    wc_ref,      # (ND, OUT)      f32  proj_comment weight, column-offset padded
    ws_ref,      # (ND, OUT)      f32  proj_spotlight weight, column-offset padded
    b_ref,       # (1, OUT)       f32  fused bias
    out_ref,     # (TM, OUT)      f32
    *,
    num_cat: int,
    vocab_pad: int,
):
    tm = idx_ref.shape[0]
    cv = num_cat * vocab_pad

    # Clamp ids in-kernel (guards padded/ragged rows and OOV ids; matches JAX
    # gather-clamp semantics used by the reference).
    idx = jnp.clip(idx_ref[...], 0, vocab_pad - 1)            # (TM, C)

    # One-hot over all categories: column for (category c, vocab id v) is
    # c*vocab_pad + v.  Build the per-column target id with (C-1) selects and do a
    # single full-width compare.
    col = jax.lax.broadcasted_iota(jnp.int32, (tm, cv), 1)
    target = jnp.broadcast_to(idx[:, 0:1], (tm, cv))
    for c in range(1, num_cat):                               # static, small
        target = jnp.where(col >= c * vocab_pad, idx[:, c:c + 1] + c * vocab_pad, target)
    onehot = (col == target).astype(jnp.float32)              # (TM, C*Vpad)

    # Four lane-aligned MXU passes; each weight already sits at its output-column
    # offset so the accumulates are full-width and need no in-kernel concat.
    acc = jnp.dot(onehot, w_emb_ref[...], preferred_element_type=jnp.float32)
    acc = acc + jnp.dot(fx_ref[...], wf_ref[...], preferred_element_type=jnp.float32)
    acc = acc + jnp.dot(cm_ref[...], wc_ref[...], preferred_element_type=jnp.float32)
    acc = acc + jnp.dot(sp_ref[...], ws_ref[...], preferred_element_type=jnp.float32)

    out_ref[...] = (acc + b_ref[...]).astype(out_ref.dtype)


def pack_embedding_heads_params(emb_tables, wf, bf, wc, bc, ws, bs):
    """Pack parameters ONCE (outside the per-call jitted path).

    emb_tables: (C, Vpad, E) stacked (zero-padded) embedding tables.
    wf/wc/ws are (in, out) layout (i.e. already transposed vs. nn.Linear.weight).
    Returns (w_emb, wf_p, wc_p, ws_p, b_p) with all weights placed at their output
    column offsets so the kernel can dot-accumulate full-width.
    """
    num_cat, vocab_pad, emb_dim = (int(s) for s in emb_tables.shape)
    out_dim = (num_cat + 3) * emb_dim
    fd = int(wf.shape[0])
    nd = int(wc.shape[0])

    w_emb = np.zeros((num_cat * vocab_pad, out_dim), np.float32)
    for c in range(num_cat):
        w_emb[c * vocab_pad:(c + 1) * vocab_pad,
              c * emb_dim:(c + 1) * emb_dim] = np.asarray(emb_tables[c], np.float32)

    wf_p = np.zeros((fd, out_dim), np.float32)
    wf_p[:, num_cat * emb_dim:(num_cat + 1) * emb_dim] = np.asarray(wf, np.float32)
    wc_p = np.zeros((nd, out_dim), np.float32)
    wc_p[:, (num_cat + 1) * emb_dim:(num_cat + 2) * emb_dim] = np.asarray(wc, np.float32)
    ws_p = np.zeros((nd, out_dim), np.float32)
    ws_p[:, (num_cat + 2) * emb_dim:(num_cat + 3) * emb_dim] = np.asarray(ws, np.float32)

    b_p = np.zeros((1, out_dim), np.float32)
    b_p[0, num_cat * emb_dim:(num_cat + 1) * emb_dim] = np.asarray(bf, np.float32)
    b_p[0, (num_cat + 1) * emb_dim:(num_cat + 2) * emb_dim] = np.asarray(bc, np.float32)
    b_p[0, (num_cat + 2) * emb_dim:(num_cat + 3) * emb_dim] = np.asarray(bs, np.float32)

    return (jnp.asarray(w_emb), jnp.asarray(wf_p), jnp.asarray(wc_p),
            jnp.asarray(ws_p), jnp.asarray(b_p))


@functools.partial(jax.jit, static_argnames=("tm",))
def embedding_heads(float_inputs, idx_inputs, comment_vecs, spotlight_vecs,
                    w_emb, wf_p, wc_p, ws_p, b_p, *, tm=1024):
    """Returns (..., (C+3)*E) matching the PyTorch concat order
    [emb_0..emb_{C-1}, float_proj, comment_proj, spotlight_proj]."""
    lead = float_inputs.shape[:-1]
    fd = float_inputs.shape[-1]
    nd = comment_vecs.shape[-1]
    num_cat = idx_inputs.shape[-1]
    cv, out_dim = w_emb.shape
    vocab_pad = cv // num_cat

    n = int(np.prod(lead))
    f32 = jnp.float32

    idx = idx_inputs.reshape(n, num_cat).astype(jnp.int32)
    fx = float_inputs.reshape(n, fd).astype(f32)
    cm = comment_vecs.reshape(n, nd).astype(f32)
    sp = spotlight_vecs.reshape(n, nd).astype(f32)

    # Row tiling: big tiles, but keep >=2 grid steps when possible (v7x megacore),
    # and rely on Pallas boundary masking for any ragged tail (no jnp.pad).
    tm_eff = min(tm, max(8, _round_up(_cdiv(n, 2), 8)))
    grid = (_cdiv(n, tm_eff),)

    row = lambda i: (i, 0)
    full = lambda i: (0, 0)

    kernel = functools.partial(
        _embedding_heads_kernel, num_cat=num_cat, vocab_pad=vocab_pad)

    out = pl.pallas_call(
        kernel,
        out_shape=jax.ShapeDtypeStruct((n, out_dim), f32),
        grid_spec=pltpu.PrefetchScalarGridSpec(
            num_scalar_prefetch=0,
            grid=grid,
            in_specs=[
                pl.BlockSpec((tm_eff, num_cat), row),   # idx
                pl.BlockSpec((tm_eff, fd), row),        # float_inputs
                pl.BlockSpec((tm_eff, nd), row),        # comment_vecs
                pl.BlockSpec((tm_eff, nd), row),        # spotlight_vecs
                pl.BlockSpec((cv, out_dim), full),      # stacked embedding tables (resident)
                pl.BlockSpec((fd, out_dim), full),      # proj_float weight
                pl.BlockSpec((nd, out_dim), full),      # proj_comment weight
                pl.BlockSpec((nd, out_dim), full),      # proj_spotlight weight
                pl.BlockSpec((1, out_dim), full),       # fused bias
            ],
            out_specs=pl.BlockSpec((tm_eff, out_dim), row),
        ),
        compiler_params=pltpu.CompilerParams(
            dimension_semantics=("parallel",)),
    )(idx, fx, cm, sp, w_emb, wf_p, wc_p, ws_p, b_p)

    return out.reshape(*lead, out_dim)


def _reference(float_inputs, idx_inputs, comment_vecs, spotlight_vecs,
               emb_tables, wf, bf, wc, bc, ws, bs):
    num_cat = emb_tables.shape[0]
    parts = [emb_tables[c][idx_inputs[..., c]] for c in range(num_cat)]
    parts.append(float_inputs @ wf + bf)
    parts.append(comment_vecs @ wc + bc)
    parts.append(spotlight_vecs @ ws + bs)
    return jnp.concatenate(parts, axis=-1)


if __name__ == "__main__":
    # Small shapes consistent with the module's forward.
    B, S = 2, 8
    FLOAT_DIM = 8
    NLP_DIM = 32
    EMB_DIM = 16
    VOCAB_SIZES = [5, 7, 11]          # len(enc.classes_) per label encoder
    NUM_CAT = len(VOCAB_SIZES)
    VOCAB_PAD = 16                    # pad tables to a common vocab for stacking

    key = jax.random.PRNGKey(0)
    keys = jax.random.split(key, 16)

    # Parameters (deterministic, in-script), weights in (in, out) layout.
    emb_tables = jnp.zeros((NUM_CAT, VOCAB_PAD, EMB_DIM), jnp.float32)
    for c, v in enumerate(VOCAB_SIZES):
        tbl = jax.random.normal(keys[c], (v, EMB_DIM), jnp.float32)
        emb_tables = emb_tables.at[c, :v, :].set(tbl)

    wf = jax.random.normal(keys[4], (FLOAT_DIM, EMB_DIM), jnp.float32) * 0.1
    bf = jax.random.normal(keys[5], (EMB_DIM,), jnp.float32) * 0.1
    wc = jax.random.normal(keys[6], (NLP_DIM, EMB_DIM), jnp.float32) * 0.1
    bc = jax.random.normal(keys[7], (EMB_DIM,), jnp.float32) * 0.1
    ws = jax.random.normal(keys[8], (NLP_DIM, EMB_DIM), jnp.float32) * 0.1
    bs = jax.random.normal(keys[9], (EMB_DIM,), jnp.float32) * 0.1

    # One-time parameter packing (outside the jitted per-call path).
    packed = pack_embedding_heads_params(emb_tables, wf, bf, wc, bc, ws, bs)

    # Inputs.
    float_inputs = jax.random.normal(keys[10], (B, S, FLOAT_DIM), jnp.float32)
    idx_inputs = jnp.stack(
        [jax.random.randint(keys[11 + c], (B, S), 0, VOCAB_SIZES[c], jnp.int32)
         for c in range(NUM_CAT)], axis=-1)                 # (B, S, NUM_CAT)
    comment_vecs = jax.random.normal(keys[14], (B, S, NLP_DIM), jnp.float32)
    spotlight_vecs = jax.random.normal(keys[15], (B, S, NLP_DIM), jnp.float32)

    out = embedding_heads(float_inputs, idx_inputs, comment_vecs, spotlight_vecs,
                          *packed)
    out = jax.block_until_ready(out)

    ref = _reference(float_inputs, idx_inputs, comment_vecs, spotlight_vecs,
                     emb_tables, wf, bf, wc, bc, ws, bs)
    assert out.shape == (B, S, (NUM_CAT + 3) * EMB_DIM), out.shape
    np.testing.assert_allclose(np.asarray(out), np.asarray(ref), rtol=1e-5, atol=1e-5)

    print("KERNEL_OK")
</pallas_src>

<mosaic_0001>
module attributes {stable_mosaic.version = 11 : i64} {
  func.func @_embedding_heads_kernel(%arg0: i32, %arg1: memref<8x3xi32, #tpu.memory_space<vmem>>, %arg2: memref<8x8xf32, #tpu.memory_space<vmem>>, %arg3: memref<8x32xf32, #tpu.memory_space<vmem>>, %arg4: memref<8x32xf32, #tpu.memory_space<vmem>>, %arg5: memref<48x96xf32, #tpu.memory_space<vmem>>, %arg6: memref<8x96xf32, #tpu.memory_space<vmem>>, %arg7: memref<32x96xf32, #tpu.memory_space<vmem>>, %arg8: memref<32x96xf32, #tpu.memory_space<vmem>>, %arg9: memref<1x96xf32, #tpu.memory_space<vmem>>, %arg10: memref<8x96xf32, #tpu.memory_space<vmem>>) attributes {dimension_semantics = [#tpu.dimension_semantics<parallel>], iteration_bounds = array<i64: 2>, scalar_prefetch = 0 : i64, scratch_operands = 0 : i64, tpu.core_type = #tpu.core_type<tc>, window_params = [{transform_indices = @transform_0, window_bounds = array<i64: 8, 3>}, {transform_indices = @transform_1, window_bounds = array<i64: 8, 8>}, {transform_indices = @transform_2, window_bounds = array<i64: 8, 32>}, {transform_indices = @transform_3, window_bounds = array<i64: 8, 32>}, {pipeline_mode = #tpu.pipeline_mode<synchronous>, transform_indices = @transform_4, window_bounds = array<i64: 48, 96>}, {pipeline_mode = #tpu.pipeline_mode<synchronous>, transform_indices = @transform_5, window_bounds = array<i64: 8, 96>}, {pipeline_mode = #tpu.pipeline_mode<synchronous>, transform_indices = @transform_6, window_bounds = array<i64: 32, 96>}, {pipeline_mode = #tpu.pipeline_mode<synchronous>, transform_indices = @transform_7, window_bounds = array<i64: 32, 96>}, {pipeline_mode = #tpu.pipeline_mode<synchronous>, transform_indices = @transform_8, window_bounds = array<i64: 1, 96>}, {transform_indices = @transform_9, window_bounds = array<i64: 8, 96>}]} {
    %c0 = arith.constant 0 : index
    %c0_0 = arith.constant 0 : index
    %0 = vector.load %arg1[%c0, %c0_0] : memref<8x3xi32, #tpu.memory_space<vmem>>, vector<8x3xi32>
    %c0_i32 = arith.constant 0 : i32
    %c15_i32 = arith.constant 15 : i32
    %1 = vector.broadcast %c0_i32 : i32 to vector<8x3xi32>
    %2 = arith.maxsi %1, %0 : vector<8x3xi32>
    %3 = vector.broadcast %c15_i32 : i32 to vector<8x3xi32>
    %4 = arith.minsi %3, %2 : vector<8x3xi32>
    %5 = tpu.iota {dimensions = array<i32: 1>} : vector<8x48xi32>
    %6 = vector.extract_strided_slice %4 {offsets = [0, 0], sizes = [8, 1], strides = [1, 1]} : vector<8x3xi32> to vector<8x1xi32>
    %7 = vector.shape_cast %6 : vector<8x1xi32> to vector<8x1xi32>
    %8 = vector.broadcast %7 : vector<8x1xi32> to vector<8x48xi32>
    %c16_i32 = arith.constant 16 : i32
    %9 = vector.broadcast %c16_i32 : i32 to vector<8x48xi32>
    %10 = arith.cmpi sge, %5, %9 : vector<8x48xi32>
    %11 = vector.extract_strided_slice %4 {offsets = [0, 1], sizes = [8, 1], strides = [1, 1]} : vector<8x3xi32> to vector<8x1xi32>
    %c16_i32_1 = arith.constant 16 : i32
    %12 = vector.broadcast %c16_i32_1 : i32 to vector<8x1xi32>
    %13 = arith.addi %11, %12 : vector<8x1xi32>
    %14 = vector.shape_cast %13 : vector<8x1xi32> to vector<8x1xi32>
    %15 = vector.broadcast %14 : vector<8x1xi32> to vector<8x48xi32>
    %16 = arith.select %10, %15, %8 : vector<8x48xi1>, vector<8x48xi32>
    %c32_i32 = arith.constant 32 : i32
    %17 = vector.broadcast %c32_i32 : i32 to vector<8x48xi32>
    %18 = arith.cmpi sge, %5, %17 : vector<8x48xi32>
    %19 = vector.extract_strided_slice %4 {offsets = [0, 2], sizes = [8, 1], strides = [1, 1]} : vector<8x3xi32> to vector<8x1xi32>
    %c32_i32_2 = arith.constant 32 : i32
    %20 = vector.broadcast %c32_i32_2 : i32 to vector<8x1xi32>
    %21 = arith.addi %19, %20 : vector<8x1xi32>
    %22 = vector.shape_cast %21 : vector<8x1xi32> to vector<8x1xi32>
    %23 = vector.broadcast %22 : vector<8x1xi32> to vector<8x48xi32>
    %24 = arith.select %18, %23, %16 : vector<8x48xi1>, vector<8x48xi32>
    %25 = arith.cmpi eq, %5, %24 : vector<8x48xi32>
    %26 = arith.extui %25 : vector<8x48xi1> to vector<8x48xi32>
    %27 = arith.sitofp %26 : vector<8x48xi32> to vector<8x48xf32>
    %c0_3 = arith.constant 0 : index
    %c0_4 = arith.constant 0 : index
    %28 = vector.load %arg5[%c0_3, %c0_4] : memref<48x96xf32, #tpu.memory_space<vmem>>, vector<48x96xf32>
    %cst = arith.constant dense<0.000000e+00> : vector<8x96xf32>
    %29 = tpu.matmul %27, %28, %cst {dimension_numbers = #tpu.dot_dimension_numbers<[1], [0], [0], [1], [0, 0, 1, 1], [], []>} : vector<8x48xf32>, vector<48x96xf32>, vector<8x96xf32> -> vector<8x96xf32>
    %c0_5 = arith.constant 0 : index
    %c0_6 = arith.constant 0 : index
    %30 = vector.load %arg2[%c0_5, %c0_6] : memref<8x8xf32, #tpu.memory_space<vmem>>, vector<8x8xf32>
    %c0_7 = arith.constant 0 : index
    %c0_8 = arith.constant 0 : index
    %31 = vector.load %arg6[%c0_7, %c0_8] : memref<8x96xf32, #tpu.memory_space<vmem>>, vector<8x96xf32>
    %cst_9 = arith.constant dense<0.000000e+00> : vector<8x96xf32>
    %32 = tpu.matmul %30, %31, %cst_9 {dimension_numbers = #tpu.dot_dimension_numbers<[1], [0], [0], [1], [0, 0, 1, 1], [], []>} : vector<8x8xf32>, vector<8x96xf32>, vector<8x96xf32> -> vector<8x96xf32>
    %33 = arith.addf %29, %32 : vector<8x96xf32>
    %c0_10 = arith.constant 0 : index
    %c0_11 = arith.constant 0 : index
    %34 = vector.load %arg3[%c0_10, %c0_11] : memref<8x32xf32, #tpu.memory_space<vmem>>, vector<8x32xf32>
    %c0_12 = arith.constant 0 : index
    %c0_13 = arith.constant 0 : index
    %35 = vector.load %arg7[%c0_12, %c0_13] : memref<32x96xf32, #tpu.memory_space<vmem>>, vector<32x96xf32>
    %cst_14 = arith.constant dense<0.000000e+00> : vector<8x96xf32>
    %36 = tpu.matmul %34, %35, %cst_14 {dimension_numbers = #tpu.dot_dimension_numbers<[1], [0], [0], [1], [0, 0, 1, 1], [], []>} : vector<8x32xf32>, vector<32x96xf32>, vector<8x96xf32> -> vector<8x96xf32>
    %37 = arith.addf %33, %36 : vector<8x96xf32>
    %c0_15 = arith.constant 0 : index
    %c0_16 = arith.constant 0 : index
    %38 = vector.load %arg4[%c0_15, %c0_16] : memref<8x32xf32, #tpu.memory_space<vmem>>, vector<8x32xf32>
    %c0_17 = arith.constant 0 : index
    %c0_18 = arith.constant 0 : index
    %39 = vector.load %arg8[%c0_17, %c0_18] : memref<32x96xf32, #tpu.memory_space<vmem>>, vector<32x96xf32>
    %cst_19 = arith.constant dense<0.000000e+00> : vector<8x96xf32>
    %40 = tpu.matmul %38, %39, %cst_19 {dimension_numbers = #tpu.dot_dimension_numbers<[1], [0], [0], [1], [0, 0, 1, 1], [], []>} : vector<8x32xf32>, vector<32x96xf32>, vector<8x96xf32> -> vector<8x96xf32>
    %41 = arith.addf %37, %40 : vector<8x96xf32>
    %c0_20 = arith.constant 0 : index
    %c0_21 = arith.constant 0 : index
    %42 = vector.load %arg9[%c0_20, %c0_21] : memref<1x96xf32, #tpu.memory_space<vmem>>, vector<1x96xf32>
    %43 = vector.broadcast %42 : vector<1x96xf32> to vector<8x96xf32>
    %44 = arith.addf %41, %43 : vector<8x96xf32>
    %c0_22 = arith.constant 0 : index
    %c0_23 = arith.constant 0 : index
    %45 = vector.load %arg10[%c0_22, %c0_23] : memref<8x96xf32, #tpu.memory_space<vmem>>, vector<8x96xf32>
    tpu.vector_store %arg10[%c0_22, %c0_23], %44 {strides = array<i32>} : memref<8x96xf32, #tpu.memory_space<vmem>>, vector<8x96xf32>,
    return
  }
  func.func @transform_0(%arg0: i32) -> (i32, i32) {
    %c0_i32 = arith.constant 0 : i32
    %c0_i32_0 = arith.constant 0 : i32
    return %arg0, %c0_i32 : i32, i32
  }
  func.func @transform_1(%arg0: i32) -> (i32, i32) {
    %c0_i32 = arith.constant 0 : i32
    %c0_i32_0 = arith.constant 0 : i32
    return %arg0, %c0_i32 : i32, i32
  }
  func.func @transform_2(%arg0: i32) -> (i32, i32) {
    %c0_i32 = arith.constant 0 : i32
    %c0_i32_0 = arith.constant 0 : i32
    return %arg0, %c0_i32 : i32, i32
  }
  func.func @transform_3(%arg0: i32) -> (i32, i32) {
    %c0_i32 = arith.constant 0 : i32
    %c0_i32_0 = arith.constant 0 : i32
    return %arg0, %c0_i32 : i32, i32
  }
  func.func @transform_4(%arg0: i32) -> (i32, i32) {
    %c0_i32 = arith.constant 0 : i32
    %c0_i32_0 = arith.constant 0 : i32
    %c0_i32_1 = arith.constant 0 : i32
    return %c0_i32, %c0_i32_0 : i32, i32
  }
  func.func @transform_5(%arg0: i32) -> (i32, i32) {
    %c0_i32 = arith.constant 0 : i32
    %c0_i32_0 = arith.constant 0 : i32
    %c0_i32_1 = arith.constant 0 : i32
    return %c0_i32, %c0_i32_0 : i32, i32
  }
  func.func @transform_6(%arg0: i32) -> (i32, i32) {
    %c0_i32 = arith.constant 0 : i32
    %c0_i32_0 = arith.constant 0 : i32
    %c0_i32_1 = arith.constant 0 : i32
    return %c0_i32, %c0_i32_0 : i32, i32
  }
  func.func @transform_7(%arg0: i32) -> (i32, i32) {
    %c0_i32 = arith.constant 0 : i32
    %c0_i32_0 = arith.constant 0 : i32
    %c0_i32_1 = arith.constant 0 : i32
    return %c0_i32, %c0_i32_0 : i32, i32
  }
  func.func @transform_8(%arg0: i32) -> (i32, i32) {
    %c0_i32 = arith.constant 0 : i32
    %c0_i32_0 = arith.constant 0 : i32
    %c0_i32_1 = arith.constant 0 : i32
    return %c0_i32, %c0_i32_0 : i32, i32
  }
  func.func @transform_9(%arg0: i32) -> (i32, i32) {
    %c0_i32 = arith.constant 0 : i32
    %c0_i32_0 = arith.constant 0 : i32
    return %arg0, %c0_i32 : i32, i32
  }
}

</mosaic_0001>

<llo_original>
// kernel: embedding_heads.1
$region0: #{embedding_heads.1}
  #allocation0 [shape = 'u32[]', space=smem, size = 0x4, offset = 0x4, fixed_abs, tag = 'smem constant byte address 0x4 - core index']
  #allocation1 [shape = 'u32[72,128]{1,0:T(1,128)}', space=vmem, size = 0x9000, scoped, tag = 'internal scratch']
  %s0 = inlined_call_operand.vmem [shape: s32[16,3], index: 0, kind: input, shape index: {}]
  %s1 = inlined_call_operand.hbm [shape: f32[16,8], index: 1, kind: input, shape index: {}]
  %s2 = inlined_call_operand.hbm [shape: f32[16,32], index: 2, kind: input, shape index: {}]
  %s3 = inlined_call_operand.hbm [shape: f32[16,32], index: 3, kind: input, shape index: {}]
  %s4 = inlined_call_operand.hbm [shape: f32[48,96], index: 4, kind: input, shape index: {}]
  %s5 = inlined_call_operand.hbm [shape: f32[8,96], index: 5, kind: input, shape index: {}]
  %s6 = inlined_call_operand.hbm [shape: f32[32,96], index: 6, kind: input, shape index: {}]
  %s7 = inlined_call_operand.vmem [shape: f32[32,96], index: 7, kind: input, shape index: {}]
  %s8 = inlined_call_operand.vmem [shape: f32[1,96], index: 8, kind: input, shape index: {}]
  %s9 = inlined_call_operand.hbm [shape: f32[16,96], index: 9, kind: output, shape index: {}]
  %s10 = sld [smem:[#allocation0]]
  $region93: #{embedding_heads.1} parent=0
    _
  %s12 = ssub.s32 1, %s10
  %s13 = scalar_select 0, %s12, %s10
  $region1: #{embedding_heads.1} parent=0
    #allocation2 [shape = 'u8[8192]{0}', space=vmem, size = 0x2000, scoped, tag = 'input window, operand 1']
    #allocation3 [shape = 's32[2]{0}', space=sflag, size = 0x8, scoped, tag = 'scoped memory for embedding_heads.1']
    #allocation4 [shape = 's32[2]{0}', space=sflag, size = 0x8, scoped, tag = 'scoped memory for embedding_heads.1']
    #allocation5 [shape = 'u8[8192]{0}', space=vmem, size = 0x2000, scoped, tag = 'input window, operand 2']
    #allocation6 [shape = 's32[2]{0}', space=sflag, size = 0x8, scoped, tag = 'scoped memory for embedding_heads.1']
    #allocation7 [shape = 'u8[8192]{0}', space=vmem, size = 0x2000, scoped, tag = 'input window, operand 3']
    #allocation8 [shape = 'u8[24576]{0}', space=vmem, size = 0x6000, scoped, tag = 'input window, operand 4, single buffered']
    #allocation9 [shape = 's32[1]{0}', space=sflag, size = 0x4, scoped, tag = 'scoped memory for embedding_heads.1']
    #allocation10 [shape = 'u8[4096]{0}', space=vmem, size = 0x1000, scoped, tag = 'input window, operand 5, single buffered']
    #allocation11 [shape = 'u8[16384]{0}', space=vmem, size = 0x4000, scoped, tag = 'input window, operand 6, single buffered']
    #allocation12 [shape = 's32[1]{0}', space=sflag, size = 0x4, scoped, tag = 'scoped memory for embedding_heads.1']
    #allocation13 [shape = 'u8[8192]{0}', space=vmem, size = 0x2000, scoped, tag = 'output window, operand 0']
    %14 = vsyncpa [#allocation3], 0
    %s15 = scalar_lea.sflag [#allocation3], 1
    %16 = vsyncpa %s15, 0
    %17 = vsyncpa [#allocation6], 0
    %s18 = scalar_lea.sflag [#allocation6], 1
    %19 = vsyncpa %s18, 0
    %20 = vsyncpa [#allocation9], 0
    %21 = vsyncpa [#allocation12], 0
    %22 = vsyncpa [#allocation4], 0
    %s23 = scalar_lea.sflag [#allocation4], 1
    %24 = vsyncpa %s23, 0
    loop: start=0, step=1, limit=4
    $region2: #{embedding_heads.1} parent=1 // loop_pre_header
      _
    $region3: #{embedding_heads.1} parent=1 // loop_header
      %s26 = sphi 0, %s30
      %p27 = scmp.ge.s32.totalorder %s26, 4
      %s36 = sphi 0, %s38
      %s39 = sphi 0, %s36
      %s40 = sphi 0, %s39
      %s56 = sphi 0, %s40
      %s62 = sphi 0, %s64
      %s65 = sphi 0, %s62
      %s66 = sphi 0, %s65
      %s82 = sphi 0, %s66
      %s88 = sphi 0, %s90
      %s91 = sphi 0, %s88
      %s92 = sphi 0, %s91
      %s108 = sphi 0, %s92
      %s114 = sphi 0, %s116
      %s117 = sphi 0, %s114
      %s118 = sphi 0, %s117
      %s134 = sphi 0, %s118
      %s138 = sphi 0, %s138
      %s140 = sphi 0, %s138
      %s141 = sphi 0, %s140
      %s155 = sphi 0, %s141
      %s159 = sphi 0, %s159
      %s161 = sphi 0, %s159
      %s162 = sphi 0, %s161
      %s176 = sphi 0, %s162
      %s180 = sphi 0, %s180
      %s182 = sphi 0, %s180
      %s183 = sphi 0, %s182
      %s197 = sphi 0, %s183
      %s201 = sphi 0, %s201
      %s203 = sphi 0, %s201
      %s204 = sphi 0, %s203
      %s218 = sphi 0, %s204
      %s222 = sphi 0, %s222
      %s224 = sphi 0, %s222
      %s225 = sphi 0, %s224
      %s239 = sphi 0, %s225
      %s245 = sphi 0, %s247
      %s248 = sphi 0, %s245
      %s249 = sphi 0, %s248
      %s265 = sphi 0, %s249
    $region4: #{embedding_heads.1} parent=1 // loop_header_branch
      %29 = sbr.rel (%p27) target = $region8
    $region5: #{embedding_heads.1} parent=1 // loop_body
      %s31 = ssub.s32 %s26, 1
      %s32 = ssub.s32 %s26, 2
      %s33 = sadd.s32 %s26, 1
      %s34 = ssub.s32 %s26, %s33
      %p35 = scmp.eq.s32.totalorder %s34, 0
      %s37 = sadd.s32 %s36, 1
      %s38 = scalar_select %p35, %s36, %s37
      %p41 = pneg %p35
      %p42 = scmp.eq.s32.totalorder %s26, 1
      %p43 = por %p41, %p42
      %p44 = scmp.ne.s32.totalorder %s36, %s39
      %p45 = scmp.eq.s32.totalorder %s26, 0
      %p46 = por %p44, %p45
      %p47 = scmp.ne.s32.totalorder %s36, %s39
      %p48 = scmp.eq.s32.totalorder %s31, 1
      %p49 = por %p47, %p48
      %p50 = scmp.ne.s32.totalorder %s39, %s40
      %p51 = scmp.eq.s32.totalorder %s31, 0
      %p52 = por %p50, %p51
      %p53 = scmp.ne.s32.totalorder %s39, %s40
      %p54 = scmp.eq.s32.totalorder %s32, 1
      %p55 = por %p53, %p54
      %p57 = scmp.ne.s32.totalorder %s40, %s56
      %p58 = scmp.eq.s32.totalorder %s32, 0
      %p59 = por %p57, %p58
      %s60 = ssub.s32 %s26, %s33
      %p61 = scmp.eq.s32.totalorder %s60, 0
      %s63 = sadd.s32 %s62, 1
      %s64 = scalar_select %p61, %s62, %s63
      %p67 = pneg %p61
      %p68 = scmp.eq.s32.totalorder %s26, 1
      %p69 = por %p67, %p68
      %p70 = scmp.ne.s32.totalorder %s62, %s65
      %p71 = scmp.eq.s32.totalorder %s26, 0
      %p72 = por %p70, %p71
      %p73 = scmp.ne.s32.totalorder %s62, %s65
      %p74 = scmp.eq.s32.totalorder %s31, 1
      %p75 = por %p73, %p74
      %p76 = scmp.ne.s32.totalorder %s65, %s66
      %p77 = scmp.eq.s32.totalorder %s31, 0
      %p78 = por %p76, %p77
      %p79 = scmp.ne.s32.totalorder %s65, %s66
      %p80 = scmp.eq.s32.totalorder %s32, 1
      %p81 = por %p79, %p80
      %p83 = scmp.ne.s32.totalorder %s66, %s82
      %p84 = scmp.eq.s32.totalorder %s32, 0
      %p85 = por %p83, %p84
      %s86 = ssub.s32 %s26, %s33
      %p87 = scmp.eq.s32.totalorder %s86, 0
      %s89 = sadd.s32 %s88, 1
      %s90 = scalar_select %p87, %s88, %s89
      %p93 = pneg %p87
      %p94 = scmp.eq.s32.totalorder %s26, 1
      %p95 = por %p93, %p94
      %p96 = scmp.ne.s32.totalorder %s88, %s91
      %p97 = scmp.eq.s32.totalorder %s26, 0
      %p98 = por %p96, %p97
      %p99 = scmp.ne.s32.totalorder %s88, %s91
      %p100 = scmp.eq.s32.totalorder %s31, 1
      %p101 = por %p99, %p100
      %p102 = scmp.ne.s32.totalorder %s91, %s92
      %p103 = scmp.eq.s32.totalorder %s31, 0
      %p104 = por %p102, %p103
      %p105 = scmp.ne.s32.totalorder %s91, %s92
      %p106 = scmp.eq.s32.totalorder %s32, 1
      %p107 = por %p105, %p106
      %p109 = scmp.ne.s32.totalorder %s92, %s108
      %p110 = scmp.eq.s32.totalorder %s32, 0
      %p111 = por %p109, %p110
      %s112 = ssub.s32 %s26, %s33
      %p113 = scmp.eq.s32.totalorder %s112, 0
      %s115 = sadd.s32 %s114, 1
      %s116 = scalar_select %p113, %s114, %s115
      %p119 = pneg %p113
      %p120 = scmp.eq.s32.totalorder %s26, 1
      %p121 = por %p119, %p120
      %p122 = scmp.ne.s32.totalorder %s114, %s117
      %p123 = scmp.eq.s32.totalorder %s26, 0
      %p124 = por %p122, %p123
      %p125 = scmp.ne.s32.totalorder %s114, %s117
      %p126 = scmp.eq.s32.totalorder %s31, 1
      %p127 = por %p125, %p126
      %p128 = scmp.ne.s32.totalorder %s117, %s118
      %p129 = scmp.eq.s32.totalorder %s31, 0
      %p130 = por %p128, %p129
      %p131 = scmp.ne.s32.totalorder %s117, %s118
      %p132 = scmp.eq.s32.totalorder %s32, 1
      %p133 = por %p131, %p132
      %p135 = scmp.ne.s32.totalorder %s118, %s134
      %p136 = scmp.eq.s32.totalorder %s32, 0
      %p137 = por %p135, %p136
      %s139 = sadd.s32 %s138, 1
      %p142 = scmp.eq.s32.totalorder %s26, 1
      %p143 = scmp.ne.s32.totalorder %s138, %s140
      %p144 = scmp.eq.s32.totalorder %s26, 0
      %p145 = por %p143, %p144
      %p146 = scmp.ne.s32.totalorder %s138, %s140
      %p147 = scmp.eq.s32.totalorder %s31, 1
      %p148 = por %p146, %p147
      %p149 = scmp.ne.s32.totalorder %s140, %s141
      %p150 = scmp.eq.s32.totalorder %s31, 0
      %p151 = por %p149, %p150
      %p152 = scmp.ne.s32.totalorder %s140, %s141
      %p153 = scmp.eq.s32.totalorder %s32, 1
      %p154 = por %p152, %p153
      %p156 = scmp.ne.s32.totalorder %s141, %s155
      %p157 = scmp.eq.s32.totalorder %s32, 0
      %p158 = por %p156, %p157
      %s160 = sadd.s32 %s159, 1
      %p163 = scmp.eq.s32.totalorder %s26, 1
      %p164 = scmp.ne.s32.totalorder %s159, %s161
      %p165 = scmp.eq.s32.totalorder %s26, 0
      %p166 = por %p164, %p165
      %p167 = scmp.ne.s32.totalorder %s159, %s161
      %p168 = scmp.eq.s32.totalorder %s31, 1
      %p169 = por %p167, %p168
      %p170 = scmp.ne.s32.totalorder %s161, %s162
      %p171 = scmp.eq.s32.totalorder %s31, 0
      %p172 = por %p170, %p171
      %p173 = scmp.ne.s32.totalorder %s161, %s162
      %p174 = scmp.eq.s32.totalorder %s32, 1
      %p175 = por %p173, %p174
      %p177 = scmp.ne.s32.totalorder %s162, %s176
      %p178 = scmp.eq.s32.totalorder %s32, 0
      %p179 = por %p177, %p178
      %s181 = sadd.s32 %s180, 1
      %p184 = scmp.eq.s32.totalorder %s26, 1
      %p185 = scmp.ne.s32.totalorder %s180, %s182
      %p186 = scmp.eq.s32.totalorder %s26, 0
      %p187 = por %p185, %p186
      %p188 = scmp.ne.s32.totalorder %s180, %s182
      %p189 = scmp.eq.s32.totalorder %s31, 1
      %p190 = por %p188, %p189
      %p191 = scmp.ne.s32.totalorder %s182, %s183
      %p192 = scmp.eq.s32.totalorder %s31, 0
      %p193 = por %p191, %p192
      %p194 = scmp.ne.s32.totalorder %s182, %s183
      %p195 = scmp.eq.s32.totalorder %s32, 1
      %p196 = por %p194, %p195
      %p198 = scmp.ne.s32.totalorder %s183, %s197
      %p199 = scmp.eq.s32.totalorder %s32, 0
      %p200 = por %p198, %p199
      %s202 = sadd.s32 %s201, 1
      %p205 = scmp.eq.s32.totalorder %s26, 1
      %p206 = scmp.ne.s32.totalorder %s201, %s203
      %p207 = scmp.eq.s32.totalorder %s26, 0
      %p208 = por %p206, %p207
      %p209 = scmp.ne.s32.totalorder %s201, %s203
      %p210 = scmp.eq.s32.totalorder %s31, 1
      %p211 = por %p209, %p210
      %p212 = scmp.ne.s32.totalorder %s203, %s204
      %p213 = scmp.eq.s32.totalorder %s31, 0
      %p214 = por %p212, %p213
      %p215 = scmp.ne.s32.totalorder %s203, %s204
      %p216 = scmp.eq.s32.totalorder %s32, 1
      %p217 = por %p215, %p216
      %p219 = scmp.ne.s32.totalorder %s204, %s218
      %p220 = scmp.eq.s32.totalorder %s32, 0
      %p221 = por %p219, %p220
      %s223 = sadd.s32 %s222, 1
      %p226 = scmp.eq.s32.totalorder %s26, 1
      %p227 = scmp.ne.s32.totalorder %s222, %s224
      %p228 = scmp.eq.s32.totalorder %s26, 0
      %p229 = por %p227, %p228
      %p230 = scmp.ne.s32.totalorder %s222, %s224
      %p231 = scmp.eq.s32.totalorder %s31, 1
      %p232 = por %p230, %p231
      %p233 = scmp.ne.s32.totalorder %s224, %s225
      %p234 = scmp.eq.s32.totalorder %s31, 0
      %p235 = por %p233, %p234
      %p236 = scmp.ne.s32.totalorder %s224, %s225
      %p237 = scmp.eq.s32.totalorder %s32, 1
      %p238 = por %p236, %p237
      %p240 = scmp.ne.s32.totalorder %s225, %s239
      %p241 = scmp.eq.s32.totalorder %s32, 0
      %p242 = por %p240, %p241
      %s243 = ssub.s32 %s26, %s33
      %p244 = scmp.eq.s32.totalorder %s243, 0
      %s246 = sadd.s32 %s245, 1
      %s247 = scalar_select %p244, %s245, %s246
      %p250 = pneg %p244
      %p251 = scmp.eq.s32.totalorder %s26, 1
      %p252 = por %p250, %p251
      %p253 = scmp.ne.s32.totalorder %s245, %s248
      %p254 = scmp.eq.s32.totalorder %s26, 0
      %p255 = por %p253, %p254
      %p256 = scmp.ne.s32.totalorder %s245, %s248
      %p257 = scmp.eq.s32.totalorder %s31, 1
      %p258 = por %p256, %p257
      %p259 = scmp.ne.s32.totalorder %s248, %s249
      %p260 = scmp.eq.s32.totalorder %s31, 0
      %p261 = por %p259, %p260
      %p262 = scmp.ne.s32.totalorder %s248, %s249
      %p263 = scmp.eq.s32.totalorder %s32, 1
      %p264 = por %p262, %p263
      %p266 = scmp.ne.s32.totalorder %s249, %s265
      %p267 = scmp.eq.s32.totalorder %s32, 0
      %p268 = por %p266, %p267
      %p269 = scmp.le.s32.totalorder 1, %s26
      %p270 = scmp.lt.s32.totalorder %s26, 3
      %p271 = pnand %p269, %p270
      %p272 = pneg %p271
      // Predicated region
      $region9: #{embedding_heads.1} parent=5 // pred_check
        _
      $region10: #{embedding_heads.1} parent=5 // pred_check_branch
        %274 = sbr.rel (%p271) target = $region12
      $region11: #{embedding_heads.1} parent=5 // pred_region
        %s275 = ssub.s32 %s26, 1
        // Predicated region
        $region13: #{embedding_heads.1} parent=11 // pred_check
          %p276 = pneg %p151
        $region14: #{embedding_heads.1} parent=11 // pred_check_branch
          %278 = sbr.rel (%p276) target = $region16
        $region15: #{embedding_heads.1} parent=11 // pred_region
          %280 = vsyncadd [#allocation9], 0
          %s281 = sshll.u32 %s4, 4
          %s282 = int_to_ptr.hbm [resolvable:$true] %s281
          %s283 = sshll.u32 [#allocation8], 4
          %s284 = int_to_ptr.vmem [resolvable:$true] %s283
          %289 = dma.hbm_to_vmem [thread:$0]  %s282, 768, %s284, [#allocation9], 128, 128, 8
        $region16: #{embedding_heads.1} parent=11 // pred_fallthru
          _
        // Predicated region
        $region17: #{embedding_heads.1} parent=11 // pred_check
          %p290 = pneg %p172
        $region18: #{embedding_heads.1} parent=11 // pred_check_branch
          %292 = sbr.rel (%p290) target = $region20
        $region19: #{embedding_heads.1} parent=11 // pred_region
          %294 = vsyncadd [#allocation9], 0
          %s296 = sshll.u32 %s5, 4
          %s297 = int_to_ptr.hbm [resolvable:$true] %s296
          %s298 = sshll.u32 [#allocation10], 4
          %s299 = int_to_ptr.vmem [resolvable:$true] %s298
          %301 = dma.hbm_to_vmem [thread:$0]  %s297, 128, %s299, [#allocation9]
        $region20: #{embedding_heads.1} parent=11 // pred_fallthru
          _
        // Predicated region
        $region21: #{embedding_heads.1} parent=11 // pred_check
          %p302 = pneg %p193
        $region22: #{embedding_heads.1} parent=11 // pred_check_branch
          %304 = sbr.rel (%p302) target = $region24
        $region23: #{embedding_heads.1} parent=11 // pred_region
          %306 = vsyncadd [#allocation12], 0
          %s307 = sshll.u32 %s6, 4
          %s308 = int_to_ptr.hbm [resolvable:$true] %s307
          %s309 = sshll.u32 [#allocation11], 4
          %s310 = int_to_ptr.vmem [resolvable:$true] %s309
          %315 = dma.hbm_to_vmem [thread:$0]  %s308, 512, %s310, [#allocation12], 128, 128, 8
        $region24: #{embedding_heads.1} parent=11 // pred_fallthru
          _
        // Predicated region
        $region25: #{embedding_heads.1} parent=11 // pred_check
          %p316 = pneg %p214
        $region26: #{embedding_heads.1} parent=11 // pred_check_branch
          %318 = sbr.rel (%p316) target = $region28
        $region27: #{embedding_heads.1} parent=11 // pred_region
          _
        $region28: #{embedding_heads.1} parent=11 // pred_fallthru
          _
        // Predicated region
        $region29: #{embedding_heads.1} parent=11 // pred_check
          %p319 = pneg %p235
        $region30: #{embedding_heads.1} parent=11 // pred_check_branch
          %321 = sbr.rel (%p319) target = $region32
        $region31: #{embedding_heads.1} parent=11 // pred_region
          _
        $region32: #{embedding_heads.1} parent=11 // pred_fallthru
          _
      $region12: #{embedding_heads.1} parent=5 // pred_fallthru
        _
      %p322 = scmp.lt.s32.totalorder %s26, 2
      // Predicated region
      $region33: #{embedding_heads.1} parent=5 // pred_check
        %p323 = pneg %p322
      $region34: #{embedding_heads.1} parent=5 // pred_check_branch
        %325 = sbr.rel (%p323) target = $region36
      $region35: #{embedding_heads.1} parent=5 // pred_region
        // Predicated region
        $region37: #{embedding_heads.1} parent=35 // pred_check
          %p326 = pneg %p46
        $region38: #{embedding_heads.1} parent=35 // pred_check_branch
          %328 = sbr.rel (%p326) target = $region40
        $region39: #{embedding_heads.1} parent=35 // pred_region
          %p329 = scmp.lt.s32.totalorder %s26, 1
          %s330 = scalar_select %p329, %s26, 1
          %s331 = smul.addr %s330, 8
          %s332 = scalar_lea.vmem %s0, %s331
        $region40: #{embedding_heads.1} parent=35 // pred_fallthru
          _
        // Predicated region
        $region41: #{embedding_heads.1} parent=35 // pred_check
          %p333 = pneg %p72
        $region42: #{embedding_heads.1} parent=35 // pred_check_branch
          %335 = sbr.rel (%p333) target = $region44
        $region43: #{embedding_heads.1} parent=35 // pred_region
          %s336 = sand.u32 %s62, 1
          %s337 = scalar_lea.sflag [#allocation3], %s336
          %s338 = sand.u32 %s62, 1
          %s339 = smul.addr %s338, 8
          %s340 = scalar_lea.vmem [#allocation2], %s339
          %342 = vsyncadd %s337, 0
          %s343 = smul.addr %s26, 8
          %s344 = scalar_lea.hbm %s1, %s343
          %s346 = sshll.u32 %s344, 4
          %s347 = int_to_ptr.hbm [resolvable:$true] %s346
          %s348 = sshll.u32 %s340, 4
          %s349 = int_to_ptr.vmem [resolvable:$true] %s348
          %351 = dma.hbm_to_vmem [thread:$0]  %s347, 128, %s349, %s337
        $region44: #{embedding_heads.1} parent=35 // pred_fallthru
          _
        // Predicated region
        $region45: #{embedding_heads.1} parent=35 // pred_check
          %p352 = pneg %p98
        $region46: #{embedding_heads.1} parent=35 // pred_check_branch
          %354 = sbr.rel (%p352) target = $region48
        $region47: #{embedding_heads.1} parent=35 // pred_region
          %s355 = sand.u32 %s26, 1
          %s356 = scalar_lea.sflag [#allocation6], %s355
          %s357 = sand.u32 %s88, 1
          %s358 = smul.addr %s357, 8
          %s359 = scalar_lea.vmem [#allocation5], %s358
          %361 = vsyncadd %s356, 0
          %s362 = smul.addr %s26, 8
          %s363 = scalar_lea.hbm %s2, %s362
          %s365 = sshll.u32 %s363, 4
          %s366 = int_to_ptr.hbm [resolvable:$true] %s365
          %s367 = sshll.u32 %s359, 4
          %s368 = int_to_ptr.vmem [resolvable:$true] %s367
          %370 = dma.hbm_to_vmem [thread:$0]  %s366, 128, %s368, %s356
        $region48: #{embedding_heads.1} parent=35 // pred_fallthru
          _
        // Predicated region
        $region49: #{embedding_heads.1} parent=35 // pred_check
          %p371 = pneg %p124
        $region50: #{embedding_heads.1} parent=35 // pred_check_branch
          %373 = sbr.rel (%p371) target = $region52
        $region51: #{embedding_heads.1} parent=35 // pred_region
          %s374 = sand.u32 %s26, 1
          %s375 = scalar_lea.sflag [#allocation6], %s374
          %s376 = sand.u32 %s114, 1
          %s377 = smul.addr %s376, 8
          %s378 = scalar_lea.vmem [#allocation7], %s377
          %380 = vsyncadd %s375, 0
          %s381 = smul.addr %s26, 8
          %s382 = scalar_lea.hbm %s3, %s381
          %s384 = sshll.u32 %s382, 4
          %s385 = int_to_ptr.hbm [resolvable:$true] %s384
          %s386 = sshll.u32 %s378, 4
          %s387 = int_to_ptr.vmem [resolvable:$true] %s386
          %389 = dma.hbm_to_vmem [thread:$0]  %s385, 128, %s387, %s375
        $region52: #{embedding_heads.1} parent=35 // pred_fallthru
          _
      $region36: #{embedding_heads.1} parent=5 // pred_fallthru
        _
      %p390 = scmp.le.s32.totalorder 1, %s26
      %p391 = scmp.lt.s32.totalorder %s26, 3
      %p392 = pnand %p390, %p391
      %p393 = pneg %p392
      // Predicated region
      $region53: #{embedding_heads.1} parent=5 // pred_check
        _
      $region54: #{embedding_heads.1} parent=5 // pred_check_branch
        %395 = sbr.rel (%p392) target = $region56
      $region55: #{embedding_heads.1} parent=5 // pred_region
        %s396 = ssub.s32 %s26, 1
        %s397 = sand.u32 %s65, 1
        %s398 = scalar_lea.sflag [#allocation3], %s397
        %s399 = sand.u32 %s65, 1
        %s400 = smul.addr %s399, 8
        %s401 = scalar_lea.vmem [#allocation2], %s400
        // Predicated region
        $region57: #{embedding_heads.1} parent=55 // pred_check
          %p402 = pneg %p78
        $region58: #{embedding_heads.1} parent=55 // pred_check_branch
          %404 = sbr.rel (%p402) target = $region60
        $region59: #{embedding_heads.1} parent=55 // pred_region
          %406 = dma.done %s398, 128
        $region60: #{embedding_heads.1} parent=55 // pred_fallthru
          _
        %s407 = sand.u32 %s31, 1
        %s408 = scalar_lea.sflag [#allocation6], %s407
        %s409 = sand.u32 %s91, 1
        %s410 = smul.addr %s409, 8
        %s411 = scalar_lea.vmem [#allocation5], %s410
        // Predicated region
        $region61: #{embedding_heads.1} parent=55 // pred_check
          %p412 = pneg %p104
        $region62: #{embedding_heads.1} parent=55 // pred_check_branch
          %414 = sbr.rel (%p412) target = $region64
        $region63: #{embedding_heads.1} parent=55 // pred_region
          %416 = dma.done %s408, 128
        $region64: #{embedding_heads.1} parent=55 // pred_fallthru
          _
        %s417 = sand.u32 %s31, 1
        %s418 = scalar_lea.sflag [#allocation6], %s417
        %s419 = sand.u32 %s117, 1
        %s420 = smul.addr %s419, 8
        %s421 = scalar_lea.vmem [#allocation7], %s420
        // Predicated region
        $region65: #{embedding_heads.1} parent=55 // pred_check
          %p422 = pneg %p130
        $region66: #{embedding_heads.1} parent=55 // pred_check_branch
          %424 = sbr.rel (%p422) target = $region68
        $region67: #{embedding_heads.1} parent=55 // pred_region
          %426 = dma.done %s418, 128
        $region68: #{embedding_heads.1} parent=55 // pred_fallthru
          _
        // Predicated region
        $region69: #{embedding_heads.1} parent=55 // pred_check
          %p427 = pneg %p151
        $region70: #{embedding_heads.1} parent=55 // pred_check_branch
          %429 = sbr.rel (%p427) target = $region72
        $region71: #{embedding_heads.1} parent=55 // pred_region
          %431 = dma.done [#allocation9], 768
        $region72: #{embedding_heads.1} parent=55 // pred_fallthru
          _
        // Predicated region
        $region73: #{embedding_heads.1} parent=55 // pred_check
          %p432 = pneg %p172
        $region74: #{embedding_heads.1} parent=55 // pred_check_branch
          %434 = sbr.rel (%p432) target = $region76
        $region75: #{embedding_heads.1} parent=55 // pred_region
          %436 = dma.done [#allocation9], 128
        $region76: #{embedding_heads.1} parent=55 // pred_fallthru
          _
        // Predicated region
        $region77: #{embedding_heads.1} parent=55 // pred_check
          %p437 = pneg %p193
        $region78: #{embedding_heads.1} parent=55 // pred_check_branch
          %439 = sbr.rel (%p437) target = $region80
        $region79: #{embedding_heads.1} parent=55 // pred_region
          %441 = dma.done [#allocation12], 512
        $region80: #{embedding_heads.1} parent=55 // pred_fallthru
          _
        %p442 = scmp.lt.s32.totalorder %s31, 1
        %s443 = scalar_select %p442, %s31, 1
        %s444 = smul.addr %s443, 8
        %s445 = scalar_lea.vmem %s0, %s444
        %p446 = pneg %p52
        %p447 = pneg %p49
        %s448 = sand.u32 %s65, 1
        %s449 = scalar_lea.sflag [#allocation3], %s448
        %s450 = sand.u32 %s65, 1
        %s451 = smul.addr %s450, 8
        %s452 = scalar_lea.vmem [#allocation2], %s451
        %p453 = pneg %p78
        %p454 = pneg %p75
        %s455 = sand.u32 %s31, 1
        %s456 = scalar_lea.sflag [#allocation6], %s455
        %s457 = sand.u32 %s91, 1
        %s458 = smul.addr %s457, 8
        %s459 = scalar_lea.vmem [#allocation5], %s458
        %p460 = pneg %p104
        %p461 = pneg %p101
        %s462 = sand.u32 %s31, 1
        %s463 = scalar_lea.sflag [#allocation6], %s462
        %s464 = sand.u32 %s117, 1
        %s465 = smul.addr %s464, 8
        %s466 = scalar_lea.vmem [#allocation7], %s465
        %p467 = pneg %p130
        %p468 = pneg %p127
        %p469 = pneg %p151
        %p470 = pneg %p148
        %p471 = pneg %p172
        %p472 = pneg %p169
        %p473 = pneg %p193
        %p474 = pneg %p190
        %p475 = pneg %p214
        %p476 = pneg %p211
        %p477 = pneg %p235
        %p478 = pneg %p232
        %p479 = pneg %p261
        %p480 = pneg %p258
        %s481 = sand.u32 %s248, 1
        %s482 = scalar_lea.sflag [#allocation4], %s481
        %s483 = sand.u32 %s248, 1
        %s484 = smul.addr %s483, 8
        %s485 = scalar_lea.vmem [#allocation13], %s484
        %p486 = scmp.lt.s32.totalorder %s31, 1
        %s487 = scalar_select %p486, %s31, 1
        %s488 = smul.addr %s487, 8
        %s489 = scalar_lea.vmem %s0, %s488
        %v490 = vld [vmem:[%s489] sm:$0xff]
        %vm491 = vcmp.gt.s32.totalorder %v490, 0
        %v492 = vsel %vm491, %v490, 0
        %vm493 = vcmp.lt.s32.totalorder %v492, 15
        %v494 = vsel %vm493, %v492, 15
        %v495 = vlaneseq
        %v496 = vand.u32 %v495, 127
        %497 = vset.pattern.permute.xlu0 0
        %498 = vperm.xlu0 %497, %v494
        %v499 = vpop.permute.xlu0 %498
        %vm500 = vcmp.ge.s32.totalorder %v496, 16
        %v501 = vadd.s32 %v494, 16
        %502 = vset.pattern.permute.xlu0 1
        %503 = vperm.xlu0 %502, %v501
        %v504 = vpop.permute.xlu0 %503
        %v505 = vsel %vm500, %v504, %v499
        %vm506 = vcmp.ge.s32.totalorder %v496, 32
        %v507 = vadd.s32 %v494, 32
        %508 = vset.pattern.permute.xlu0 2
        %509 = vperm.xlu0 %508, %v507
        %v510 = vpop.permute.xlu0 %509
        %v511 = vsel %vm506, %v510, %v505
        %vm512 = vcmp.eq.s32.totalorder %v496, %v511
        %v513 = vsel %vm512, 1, 0
        %v514 = vcvt.s32.f32 %v513
        %v515 = vld [vmem:[#allocation8] sm:$0xff]
        %v516 = vld [vmem:[#allocation8 + $0x8] sm:$0xff]
        %v517 = vld [vmem:[#allocation8 + $0x10] sm:$0xff]
        %v518 = vld [vmem:[#allocation8 + $0x18] sm:$0xff]
        %v519 = vld [vmem:[#allocation8 + $0x20] sm:$0xff]
        %v520 = vld [vmem:[#allocation8 + $0x28] sm:$0xff]
        %v521 = vld [vmem:[%s401] sm:$0xff]
        %v522 = vld [vmem:[#allocation10] sm:$0xff]
        %vm523 = vcmask 64512
        %v525 = vsel %vm523, %v521, 0
        %527 = vmatpush.msra.mxu0 0.0
        %528 = vmatpush.msra.mxu0 0.0
        %529 = vmatpush.msra.mxu0 0.0
        %530 = vmatpush.msra.mxu0 0.0
        %531 = vmatpush.msra.mxu0 0.0
        %532 = vmatpush.msra.mxu0 0.0
        %533 = vmatpush.msra.mxu0 0.0
        %534 = vmatpush.msra.mxu0 0.0
        %535 = vmatpush.msra.mxu0 0.0
        %536 = vmatpush.msra.mxu0 0.0
        %537 = vmatpush.msra.mxu0 0.0
        %538 = vmatpush.msra.mxu0 0.0
        %539 = vmatpush.msra.mxu0 0.0
        %540 = vmatpush.msra.mxu0 0.0
        %541 = vmatpush.msra.mxu0 0.0
        %542 = vmatpush.msra.mxu0 %v522
        %543 = vmatmul.f32.gmra.mxu0 %v525
        %v544 = vpop.f32.mrf.mxu0
        %v545 = vadd.f32 0.0, %v544
        %546 = vdwg.mxu0
        %vm547 = vcmask 392192
        %v549 = vsel %vm547, %v514, 0
        %551 = vmatpush.msra.mxu0 0.0
        %552 = vmatpush.msra.mxu0 0.0
        %553 = vmatpush.msra.mxu0 0.0
        %554 = vmatpush.msra.mxu0 0.0
        %555 = vmatpush.msra.mxu0 0.0
        %556 = vmatpush.msra.mxu0 0.0
        %557 = vmatpush.msra.mxu0 0.0
        %558 = vmatpush.msra.mxu0 0.0
        %559 = vmatpush.msra.mxu0 0.0
        %560 = vmatpush.msra.mxu0 0.0
        %561 = vmatpush.msra.mxu0 %v520
        %562 = vmatpush.msra.mxu0 %v519
        %563 = vmatpush.msra.mxu0 %v518
        %564 = vmatpush.msra.mxu0 %v517
        %565 = vmatpush.msra.mxu0 %v516
        %566 = vmatpush.msra.mxu0 %v515
        %567 = vmatmul.f32.gmra.mxu0 %v549
        %v568 = vpop.f32.mrf.mxu0
        %v569 = vadd.f32 %v545, %v568
        %570 = vdwg.mxu0
        %v571 = vld [vmem:[%s411] sm:$0xff]
        %v572 = vld [vmem:[#allocation11] sm:$0xff]
        %v573 = vld [vmem:[#allocation11 + $0x8] sm:$0xff]
        %v574 = vld [vmem:[#allocation11 + $0x10] sm:$0xff]
        %v575 = vld [vmem:[#allocation11 + $0x18] sm:$0xff]
        %vm576 = vcmask 261120
        %v578 = vsel %vm576, %v571, 0
        %580 = vmatpush.msra.mxu0 0.0
        %581 = vmatpush.msra.mxu0 0.0
        %582 = vmatpush.msra.mxu0 0.0
        %583 = vmatpush.msra.mxu0 0.0
        %584 = vmatpush.msra.mxu0 0.0
        %585 = vmatpush.msra.mxu0 0.0
        %586 = vmatpush.msra.mxu0 0.0
        %587 = vmatpush.msra.mxu0 0.0
        %588 = vmatpush.msra.mxu0 0.0
        %589 = vmatpush.msra.mxu0 0.0
        %590 = vmatpush.msra.mxu0 0.0
        %591 = vmatpush.msra.mxu0 0.0
        %592 = vmatpush.msra.mxu0 %v575
        %593 = vmatpush.msra.mxu0 %v574
        %594 = vmatpush.msra.mxu0 %v573
        %595 = vmatpush.msra.mxu0 %v572
        %596 = vmatmul.f32.gmra.mxu0 %v578
        %v597 = vpop.f32.mrf.mxu0
        %v598 = vadd.f32 0.0, %v597
        %599 = vdwg.mxu0
        %v600 = vadd.f32 %v569, %v598
        %v601 = vld [vmem:[%s421] sm:$0xff]
        %v602 = vld [vmem:[%s7] sm:$0xff]
        %v603 = vld [vmem:[%s7 + $0x8] sm:$0xff]
        %v604 = vld [vmem:[%s7 + $0x10] sm:$0xff]
        %v605 = vld [vmem:[%s7 + $0x18] sm:$0xff]
        %v607 = vsel %vm576, %v601, 0
        %609 = vmatpush.msra.mxu0 0.0
        %610 = vmatpush.msra.mxu0 0.0
        %611 = vmatpush.msra.mxu0 0.0
        %612 = vmatpush.msra.mxu0 0.0
        %613 = vmatpush.msra.mxu0 0.0
        %614 = vmatpush.msra.mxu0 0.0
        %615 = vmatpush.msra.mxu0 0.0
        %616 = vmatpush.msra.mxu0 0.0
        %617 = vmatpush.msra.mxu0 0.0
        %618 = vmatpush.msra.mxu0 0.0
        %619 = vmatpush.msra.mxu0 0.0
        %620 = vmatpush.msra.mxu0 0.0
        %621 = vmatpush.msra.mxu0 %v605
        %622 = vmatpush.msra.mxu0 %v604
        %623 = vmatpush.msra.mxu0 %v603
        %624 = vmatpush.msra.mxu0 %v602
        %625 = vmatmul.f32.gmra.mxu0 %v607
        %v626 = vpop.f32.mrf.mxu0
        %v627 = vadd.f32 0.0, %v626
        %628 = vdwg.mxu0
        %v629 = vadd.f32 %v600, %v627
        %v630 = vld [vmem:[%s8] sm:$0x1]
        %v632 = vperm.slane %v630, 0
        %v634 = vadd.f32 %v629, %v632
        %vm635 = vcmask 785408
        %636 = vst.msk [vmem:[%s485] sm:$0xff] %vm635, %v634
        %s637 = sand.u32 %s248, 1
        %s638 = scalar_lea.sflag [#allocation4], %s637
        %s639 = sand.u32 %s248, 1
        %s640 = smul.addr %s639, 8
        %s641 = scalar_lea.vmem [#allocation13], %s640
        // Predicated region
        $region81: #{embedding_heads.1} parent=55 // pred_check
          %p642 = pneg %p258
        $region82: #{embedding_heads.1} parent=55 // pred_check_branch
          %644 = sbr.rel (%p642) target = $region84
        $region83: #{embedding_heads.1} parent=55 // pred_region
          %646 = vsyncadd %s638, 0
          %s647 = smul.addr %s31, 8
          %s648 = scalar_lea.hbm %s9, %s647
          %s650 = sshll.u32 %s641, 4
          %s651 = int_to_ptr.vmem [resolvable:$true] %s650
          %s652 = sshll.u32 %s648, 4
          %s653 = int_to_ptr.hbm [resolvable:$true] %s652
          %655 = dma.vmem_to_hbm [thread:$0]  %s651, 128, %s653, %s638
        $region84: #{embedding_heads.1} parent=55 // pred_fallthru
          _
      $region56: #{embedding_heads.1} parent=5 // pred_fallthru
        _
      %p656 = scmp.le.s32.totalorder 2, %s26
      // Predicated region
      $region85: #{embedding_heads.1} parent=5 // pred_check
        %p657 = pneg %p656
      $region86: #{embedding_heads.1} parent=5 // pred_check_branch
        %659 = sbr.rel (%p657) target = $region88
      $region87: #{embedding_heads.1} parent=5 // pred_region
        %s660 = ssub.s32 %s26, 2
        // Predicated region
        $region89: #{embedding_heads.1} parent=87 // pred_check
          %p661 = pneg %p264
        $region90: #{embedding_heads.1} parent=87 // pred_check_branch
          %663 = sbr.rel (%p661) target = $region92
        $region91: #{embedding_heads.1} parent=87 // pred_region
          %s664 = sand.u32 %s249, 1
          %s665 = scalar_lea.sflag [#allocation4], %s664
          %s666 = sand.u32 %s249, 1
          %s667 = smul.addr %s666, 8
          %s668 = scalar_lea.vmem [#allocation13], %s667
          %670 = dma.done %s665, 128
        $region92: #{embedding_heads.1} parent=87 // pred_fallthru
          _
      $region88: #{embedding_heads.1} parent=5 // pred_fallthru
        _
    $region6: #{embedding_heads.1} parent=1 // loop_footer
      %s30 = sadd.s32 1, %s26
    $region7: #{embedding_heads.1} parent=1 // loop_footer_branch
      %25 = sbr.rel target = $region3
    $region8: #{embedding_heads.1} parent=1 // loop_exit
      _
    %671 = vsyncpa [#allocation3], 1
    %s672 = scalar_lea.sflag [#allocation3], 1
    %673 = vsyncpa %s672, 1
    %674 = vsyncpa [#allocation6], 1
    %s675 = scalar_lea.sflag [#allocation6], 1
    %676 = vsyncpa %s675, 1
    %677 = vsyncpa [#allocation9], 1
    %678 = vsyncpa [#allocation12], 1
    %679 = vsyncpa [#allocation4], 1
    %s680 = scalar_lea.sflag [#allocation4], 1
    %681 = vsyncpa %s680, 1

</llo_original>
